<compile_context>
chip_gen: v6e
topology: v6e:2x2x1
jax: 0.10.0
libtpu: 0.0.40
codegen_flags: <defaults>
</compile_context>

<pallas_src>
import functools

import jax
import jax.numpy as jnp
from jax.experimental import pallas as pl
from jax.experimental.pallas import tpu as pltpu

# ---------------- config (scaled-down, structure identical to BoxNet) ----------------
B = 2
C_BB = 64                    # backbone img_feat channels (2048 in the original)
JOINT_NUM = 25               # self.joint_num
IMG_FEAT_SHAPE = (4, 8, 8)   # cfg.MODEL.img_feat_shape = (D, H, W)
C_DECONV = 64                # deconv / head width (256 in the original)
BN_EPS = 1e-5


# ---------------- Pallas kernels ----------------

def _deconv_mm_kernel(x_ref, w_ref, b_ref, o_ref, acc_ref, *, nk):
    """y = relu(x @ w + b), K-tiled with an f32 VMEM accumulator.

    x is a bf16 (tm, tk) tile of the 4-tap sub-pixel patches, w is the bf16
    BN-folded 4-phase weight tile, bias/ReLU epilogue in f32.
    """
    @pl.when(pl.program_id(1) == 0)
    def _init():
        acc_ref[...] = jnp.zeros_like(acc_ref)

    acc_ref[...] += jnp.dot(x_ref[...], w_ref[...],
                            preferred_element_type=jnp.float32)

    @pl.when(pl.program_id(1) == nk - 1)
    def _finalize():
        o_ref[...] = jnp.maximum(acc_ref[...] + b_ref[...], 0.0)


def _deconv_mm_head_kernel(x_ref, w_ref, b_ref, hw_ref, hb_ref,
                           o_ref, hm_ref, acc_ref, *, nk):
    """Last deconv layer: same as above, plus the fused 1x1-conv heatmap head
    (hm = relu_out @ block_diag(w_1x1) + b_1x1) written as a second output —
    avoids re-reading the feature map from HBM for bbox_center_out."""
    @pl.when(pl.program_id(1) == 0)
    def _init():
        acc_ref[...] = jnp.zeros_like(acc_ref)

    acc_ref[...] += jnp.dot(x_ref[...], w_ref[...],
                            preferred_element_type=jnp.float32)

    @pl.when(pl.program_id(1) == nk - 1)
    def _finalize():
        y = jnp.maximum(acc_ref[...] + b_ref[...], 0.0)
        o_ref[...] = y
        hm_ref[...] = jnp.dot(y, hw_ref[...],
                              preferred_element_type=jnp.float32) + hb_ref[...]


def _tail_kernel(hm_ref, xs_ref, ys_ref, feat_ref,
                 lw1_ref, lb1_ref, lw2_ref, lb2_ref,
                 rw1_ref, rb1_ref, rw2_ref, rb2_ref,
                 centers_ref, sizes_ref, *, bsz):
    """Fused tail: soft-argmax over both heatmap channels, bilinear sampling of
    the feature map at both hand centers, and both 2-layer MLP size heads.

    Row layout of hm / centers / sizes is hand-major: rows [0:B] = lhand,
    rows [B:2B] = rhand.  All coordinate math stays in f32.
    """
    # ---- soft-argmax (softmax over H*W, expected x/y) ----
    hm = hm_ref[...]                                       # (2B, HW)
    m = jnp.max(hm, axis=-1, keepdims=True)
    e = jnp.exp(hm - m)
    inv = pl.reciprocal(jnp.sum(e, axis=-1, keepdims=True), approx=True)  # EUP
    xs = xs_ref[...]                                       # (1, HW)
    ys = ys_ref[...]
    cx = jnp.sum(e * xs, axis=-1, keepdims=True) * inv     # (2B, 1)
    cy = jnp.sum(e * ys, axis=-1, keepdims=True) * inv
    centers_ref[...] = jnp.concatenate([cx, cy], axis=1)   # (2B, 2)

    # ---- bilinear weight map (grid_sample align_corners=True, zeros pad) ----
    x0 = jnp.floor(cx)
    y0 = jnp.floor(cy)
    fx = cx - x0
    fy = cy - y0
    wx = (jnp.where(xs == x0, 1.0 - fx, 0.0)
          + jnp.where(xs == x0 + 1.0, fx, 0.0))            # (2B, HW)
    wy = (jnp.where(ys == y0, 1.0 - fy, 0.0)
          + jnp.where(ys == y0 + 1.0, fy, 0.0))
    w = wx * wy                                            # (2B, HW)

    # ---- sample both hands of each batch element with one small matmul ----
    lrows, rrows = [], []
    for b in range(bsz):                                   # static, bsz == 2
        wb = jnp.concatenate([w[b:b + 1, :], w[bsz + b:bsz + b + 1, :]],
                             axis=0)                       # (2, HW)
        sb = jnp.dot(wb, feat_ref[b], preferred_element_type=jnp.float32)
        lrows.append(sb[0:1, :])
        rrows.append(sb[1:2, :])
    lfeat = jnp.concatenate(lrows, axis=0)                 # (B, C)
    rfeat = jnp.concatenate(rrows, axis=0)

    # ---- the two 2-layer MLP size heads ----
    lh = jnp.maximum(
        jnp.dot(lfeat, lw1_ref[...], preferred_element_type=jnp.float32)
        + lb1_ref[...], 0.0)
    lsz = jnp.dot(lh, lw2_ref[...], preferred_element_type=jnp.float32) + lb2_ref[...]
    rh = jnp.maximum(
        jnp.dot(rfeat, rw1_ref[...], preferred_element_type=jnp.float32)
        + rb1_ref[...], 0.0)
    rsz = jnp.dot(rh, rw2_ref[...], preferred_element_type=jnp.float32) + rb2_ref[...]
    sizes_ref[...] = jnp.concatenate([lsz, rsz], axis=0)   # (2B, 2)


# ---------------- layer wrappers ----------------

def _pick_tm(mp):
    # Prefer >=2 grid steps along M so the 'parallel' axis can shard across the
    # two v7x TensorCores and overlap DMA with compute; 512 keeps per-buffer
    # VMEM modest on v7x.  (On v5e/v6e with M>=8192, 1024-2048 would amortize
    # grid-step overhead further — left as a per-generation tuning knob.)
    for t in (512, 256, 128):
        if mp % t == 0 and mp // t >= 2:
            return t
    return mp


def deconv_subpixel(x_nhwc, w_t, bn_scale, bn_shift, head_w=None, head_b=None):
    """ConvTranspose2d(k=4,s=2,p=1,bias=False) + BN(eval) + ReLU via the
    sub-pixel decomposition.  Optionally fuses the 1x1-conv heatmap head."""
    Bc, H, W, Cin = x_nhwc.shape
    Cout = w_t.shape[1]
    K = 4 * Cin
    N = 4 * Cout

    # ---- BN-folded 4-phase weight matrix: K taps (dy,dx,cin), N phases (a,b,cout) ----
    # window (i,j), tap (dy,dx) holds input row i-1+dy; output phase (a,b) is
    # real output (2i-1+a, 2j-1+b); the kernel index used is (a+2-2dy, b+2-2dx).
    k_blocks = []
    for dy in range(2):
        for dx in range(2):
            n_blocks = []
            for a in range(2):
                for b_ in range(2):
                    n_blocks.append(w_t[:, :, a + 2 - 2 * dy, b_ + 2 - 2 * dx])
            k_blocks.append(jnp.concatenate(n_blocks, axis=1))      # (Cin, 4*Cout)
    wm = jnp.concatenate(k_blocks, axis=0) * jnp.tile(bn_scale, 4)[None, :]
    bias = jnp.tile(bn_shift, 4).reshape(1, N)
    wm_b = wm.astype(jnp.bfloat16)

    # ---- 2x2-tap im2col of the 1-padded input (4x expansion, not 16x), bf16 ----
    xb = x_nhwc.astype(jnp.bfloat16)
    xp = jnp.pad(xb, ((0, 0), (1, 1), (1, 1), (0, 0)))
    taps = [xp[:, dy:dy + H + 1, dx:dx + W + 1, :]
            for dy in range(2) for dx in range(2)]
    patches = jnp.concatenate(taps, axis=-1).reshape(Bc * (H + 1) * (W + 1), K)

    M = patches.shape[0]
    Mp = ((M + 127) // 128) * 128              # pad rows so M tiles by (8,128)
    if Mp != M:
        patches = jnp.pad(patches, ((0, Mp - M), (0, 0)))
    tm = _pick_tm(Mp)

    # K grid axis (accumulator pattern) — nk > 1 only at real (2048-wide) sizes.
    tk, nk = K, 1
    if K > 2048:
        for t in (1024, 512, 256):
            if K % t == 0:
                tk, nk = t, K // t
                break

    grid = (Mp // tm, nk)
    cparams = pltpu.CompilerParams(
        dimension_semantics=("parallel", "arbitrary"),
        vmem_limit_bytes=48 * 1024 * 1024)
    common_in_specs = [
        pl.BlockSpec((tm, tk), lambda i, k: (i, k)),
        pl.BlockSpec((tk, N), lambda i, k: (k, 0)),
        pl.BlockSpec((1, N), lambda i, k: (0, 0)),
    ]

    if head_w is None:
        y = pl.pallas_call(
            functools.partial(_deconv_mm_kernel, nk=nk),
            out_shape=jax.ShapeDtypeStruct((Mp, N), jnp.float32),
            grid_spec=pltpu.PrefetchScalarGridSpec(
                num_scalar_prefetch=0, grid=grid,
                in_specs=common_in_specs,
                out_specs=pl.BlockSpec((tm, N), lambda i, k: (i, 0)),
                scratch_shapes=[pltpu.VMEM((tm, N), jnp.float32)]),
            compiler_params=cparams,
        )(patches, wm_b, bias)
        hm = None
    else:
        Chm = head_w.shape[0]                                  # 2 heat channels
        w1x1 = jnp.transpose(head_w[:, :, 0, 0], (1, 0))       # (Cout, Chm)
        hw = jnp.zeros((N, 4 * Chm), jnp.float32)              # block-diag per phase
        for p in range(4):
            hw = hw.at[p * Cout:(p + 1) * Cout, p * Chm:(p + 1) * Chm].set(w1x1)
        hb = jnp.tile(head_b, 4).reshape(1, 4 * Chm)
        y, hm = pl.pallas_call(
            functools.partial(_deconv_mm_head_kernel, nk=nk),
            out_shape=(jax.ShapeDtypeStruct((Mp, N), jnp.float32),
                       jax.ShapeDtypeStruct((Mp, 4 * Chm), jnp.float32)),
            grid_spec=pltpu.PrefetchScalarGridSpec(
                num_scalar_prefetch=0, grid=grid,
                in_specs=common_in_specs + [
                    pl.BlockSpec((N, 4 * Chm), lambda i, k: (0, 0)),
                    pl.BlockSpec((1, 4 * Chm), lambda i, k: (0, 0))],
                out_specs=[pl.BlockSpec((tm, N), lambda i, k: (i, 0)),
                           pl.BlockSpec((tm, 4 * Chm), lambda i, k: (i, 0))],
                scratch_shapes=[pltpu.VMEM((tm, N), jnp.float32)]),
            compiler_params=cparams,
        )(patches, wm_b, bias, hw, hb)

    # ---- sub-pixel (pixel-shuffle) reassembly + crop: cheap layout glue ----
    def _shuffle(t, c):
        t = t[:M].reshape(Bc, H + 1, W + 1, 2, 2, c)
        t = jnp.transpose(t, (0, 1, 3, 2, 4, 5)).reshape(Bc, 2 * H + 2, 2 * W + 2, c)
        return t[:, 1:2 * H + 1, 1:2 * W + 1, :]

    y = _shuffle(y, Cout)
    if head_w is None:
        return y
    return y, _shuffle(hm, head_w.shape[0])


def box_head_tail(hm_nhwc, feat_nhwc, lhand_p, rhand_p):
    """Single fused tail kernel: soft-argmax + bilinear sampling + MLP heads."""
    Bc, Hf, Wf, _ = feat_nhwc.shape
    HW = Hf * Wf
    # hand-major rows: [0:B]=lhand channel, [B:2B]=rhand channel
    hm = jnp.transpose(hm_nhwc, (3, 0, 1, 2)).reshape(2 * Bc, HW)
    feat = feat_nhwc.reshape(Bc, HW, -1)
    idx = jnp.arange(HW)
    xs = (idx % Wf).astype(jnp.float32).reshape(1, HW)
    ys = (idx // Wf).astype(jnp.float32).reshape(1, HW)
    lw1, lb1, lw2, lb2 = lhand_p
    rw1, rb1, rw2, rb2 = rhand_p
    centers, sizes = pl.pallas_call(
        functools.partial(_tail_kernel, bsz=Bc),
        out_shape=(jax.ShapeDtypeStruct((2 * Bc, 2), jnp.float32),
                   jax.ShapeDtypeStruct((2 * Bc, 2), jnp.float32)),
    )(hm, xs, ys, feat,
      jnp.transpose(lw1), lb1.reshape(1, -1), jnp.transpose(lw2), lb2.reshape(1, -1),
      jnp.transpose(rw1), rb1.reshape(1, -1), jnp.transpose(rw2), rb2.reshape(1, -1))
    return centers, sizes


# ---------------- exact f32 reference (16-tap im2col) for the tolerance check ----------------

def _reference_deconv_f32(x_nhwc, w_t, bn_scale, bn_shift):
    Bc, H, W, Cin = x_nhwc.shape
    Cout = w_t.shape[1]
    Ho, Wo = 2 * H, 2 * W
    z = jnp.zeros((Bc, 2 * H - 1, 2 * W - 1, Cin), jnp.float32)
    z = z.at[:, ::2, ::2, :].set(x_nhwc)
    z = jnp.pad(z, ((0, 0), (2, 2), (2, 2), (0, 0)))
    patches = jnp.stack(
        [jnp.stack([z[:, ky:ky + Ho, kx:kx + Wo, :] for kx in range(4)], axis=3)
         for ky in range(4)], axis=3)
    patches = patches.reshape(Bc * Ho * Wo, 16 * Cin)
    wm = jnp.flip(w_t, axis=(2, 3))
    wm = jnp.transpose(wm, (2, 3, 0, 1)).reshape(16 * Cin, Cout)
    wm = wm * bn_scale[None, :]
    y = jnp.maximum(patches @ wm + bn_shift[None, :], 0.0)
    return y.reshape(Bc, Ho, Wo, Cout)


# ---------------- full BoxNet forward ----------------

def boxnet_forward(params, img_feat, joint_hm, joint_img):
    # joint_img is accepted but unused, exactly as in the reference forward().
    del joint_img
    D, H, W = IMG_FEAT_SHAPE
    Bc = img_feat.shape[0]

    # joint_hm.view(B, J * D, H, W); cat with img_feat on channel axis (NCHW)
    jhm = joint_hm.reshape(Bc, JOINT_NUM * D, H, W)
    x = jnp.concatenate([img_feat, jhm], axis=1)
    x = jnp.transpose(x, (0, 2, 3, 1))                 # NCHW -> NHWC

    # self.deconv: 3 x [ConvTranspose2d + BN + ReLU], spatial x8.
    # The 1x1 bbox_center_out conv is fused into the last layer's epilogue.
    (w0, s0, sh0), (w1, s1, sh1), (w2, s2, sh2) = params['deconv']
    x = deconv_subpixel(x, w0, s0, sh0)
    x = deconv_subpixel(x, w1, s1, sh1)
    x, hm = deconv_subpixel(x, w2, s2, sh2,
                            head_w=params['center_w'], head_b=params['center_b'])

    # fused tail: soft_argmax_2d + sample_joint_features + both size MLPs
    centers, sizes = box_head_tail(hm, x, params['lhand'], params['rhand'])
    lhand_center = centers[:Bc] / D                    # / cfg.MODEL.img_feat_shape[0]
    rhand_center = centers[Bc:] / D
    lhand_size = sizes[:Bc]
    rhand_size = sizes[Bc:]
    return lhand_center, lhand_size, rhand_center, rhand_size


# ---------------- deterministic parameter initialization ----------------

def _init_bn(key, c):
    k1, k2, k3, k4 = jax.random.split(key, 4)
    gamma = 1.0 + 0.1 * jax.random.normal(k1, (c,), jnp.float32)
    beta = 0.1 * jax.random.normal(k2, (c,), jnp.float32)
    mean = 0.1 * jax.random.normal(k3, (c,), jnp.float32)
    var = 1.0 + 0.1 * jnp.abs(jax.random.normal(k4, (c,), jnp.float32))
    scale = gamma / jnp.sqrt(var + BN_EPS)
    shift = beta - mean * scale
    return scale, shift


def _init_linear(key, fin, fout):
    k1, k2 = jax.random.split(key)
    w = jax.random.normal(k1, (fout, fin), jnp.float32) / jnp.sqrt(float(fin))
    b = 0.01 * jax.random.normal(k2, (fout,), jnp.float32)
    return w, b


def init_params(key):
    D, _, _ = IMG_FEAT_SHAPE
    dims = [C_BB + JOINT_NUM * D, C_DECONV, C_DECONV, C_DECONV]
    ks = jax.random.split(key, 12)
    deconv = []
    for i in range(3):
        w = jax.random.normal(ks[i], (dims[i], dims[i + 1], 4, 4),
                              jnp.float32) / jnp.sqrt(float(dims[i] * 16))
        scale, shift = _init_bn(ks[3 + i], dims[i + 1])
        deconv.append((w, scale, shift))
    center_w = jax.random.normal(ks[6], (2, C_DECONV, 1, 1),
                                 jnp.float32) / jnp.sqrt(float(C_DECONV))
    center_b = 0.01 * jax.random.normal(ks[7], (2,), jnp.float32)
    lw1, lb1 = _init_linear(ks[8], C_DECONV, C_DECONV)
    lw2, lb2 = _init_linear(ks[9], C_DECONV, 2)
    rw1, rb1 = _init_linear(ks[10], C_DECONV, C_DECONV)
    rw2, rb2 = _init_linear(ks[11], C_DECONV, 2)
    return dict(deconv=deconv, center_w=center_w, center_b=center_b,
                lhand=(lw1, lb1, lw2, lb2), rhand=(rw1, rb1, rw2, rb2))


# ---------------- main ----------------

if __name__ == "__main__":
    key = jax.random.PRNGKey(0)
    kp, k1, k2, k3, kc = jax.random.split(key, 5)
    params = init_params(kp)

    # --- tolerance check: sub-pixel bf16 Pallas deconv vs exact f32 reference ---
    ck = jax.random.split(kc, 3)
    cx = jax.random.normal(ck[0], (1, 6, 6, 16), jnp.float32)
    cw = jax.random.normal(ck[1], (16, 8, 4, 4), jnp.float32) / 16.0
    cscale, cshift = _init_bn(ck[2], 8)
    ref = _reference_deconv_f32(cx, cw, cscale, cshift)
    got = jax.jit(deconv_subpixel)(cx, cw, cscale, cshift)
    assert ref.shape == got.shape
    max_err = float(jnp.max(jnp.abs(ref - got)))
    assert max_err < 5e-2, f"sub-pixel deconv mismatch vs f32 reference: {max_err}"

    D, H, W = IMG_FEAT_SHAPE
    img_feat = jax.random.normal(k1, (B, C_BB, H, W), jnp.float32)
    joint_hm = jax.nn.softmax(
        jax.random.normal(k2, (B, JOINT_NUM, D * H * W), jnp.float32), axis=-1
    ).reshape(B, JOINT_NUM, D, H, W)
    joint_img = jax.random.uniform(k3, (B, JOINT_NUM, 3), jnp.float32) * H  # unused

    fwd = jax.jit(boxnet_forward)
    lhand_center, lhand_size, rhand_center, rhand_size = fwd(
        params, img_feat, joint_hm, joint_img)
    jax.block_until_ready((lhand_center, lhand_size, rhand_center, rhand_size))

    assert lhand_center.shape == (B, 2)
    assert lhand_size.shape == (B, 2)
    assert rhand_center.shape == (B, 2)
    assert rhand_size.shape == (B, 2)
    print("KERNEL_OK")
</pallas_src>

<mosaic_0001>
module attributes {stable_mosaic.version = 11 : i64} {
  func.func @_deconv_mm_kernel(%arg0: i32, %arg1: i32, %arg2: memref<128x64xbf16, #tpu.memory_space<vmem>>, %arg3: memref<64x32xbf16, #tpu.memory_space<vmem>>, %arg4: memref<1x32xf32, #tpu.memory_space<vmem>>, %arg5: memref<128x32xf32, #tpu.memory_space<vmem>>, %arg6: memref<128x32xf32, #tpu.memory_space<vmem>>) attributes {dimension_semantics = [#tpu.dimension_semantics<parallel>, #tpu.dimension_semantics<arbitrary>], iteration_bounds = array<i64: 1, 1>, scalar_prefetch = 0 : i64, scratch_operands = 1 : i64, tpu.core_type = #tpu.core_type<tc>, window_params = [{transform_indices = @transform_0, window_bounds = array<i64: 128, 64>}, {transform_indices = @transform_1, window_bounds = array<i64: 64, 32>}, {pipeline_mode = #tpu.pipeline_mode<synchronous>, transform_indices = @transform_2, window_bounds = array<i64: 1, 32>}, {transform_indices = @transform_3, window_bounds = array<i64: 128, 32>}]} {
    %c0_i32 = arith.constant 0 : i32
    %0 = arith.cmpi eq, %arg1, %c0_i32 : i32
    %1 = arith.extui %0 : i1 to i32
    %c0_i32_0 = arith.constant 0 : i32
    %2 = arith.cmpi ne, %1, %c0_i32_0 : i32
    scf.if %2 {
      %cst_10 = arith.constant 0.000000e+00 : f32
      %12 = vector.broadcast %cst_10 : f32 to vector<128x32xf32>
      %c0_11 = arith.constant 0 : index
      %c0_12 = arith.constant 0 : index
      %13 = vector.load %arg6[%c0_11, %c0_12] : memref<128x32xf32, #tpu.memory_space<vmem>>, vector<128x32xf32>
      tpu.vector_store %arg6[%c0_11, %c0_12], %12 {strides = array<i32>} : memref<128x32xf32, #tpu.memory_space<vmem>>, vector<128x32xf32>,
    } else {
    }
    %c0 = arith.constant 0 : index
    %c0_1 = arith.constant 0 : index
    %3 = vector.load %arg6[%c0, %c0_1] : memref<128x32xf32, #tpu.memory_space<vmem>>, vector<128x32xf32>
    %c0_2 = arith.constant 0 : index
    %c0_3 = arith.constant 0 : index
    %4 = vector.load %arg2[%c0_2, %c0_3] : memref<128x64xbf16, #tpu.memory_space<vmem>>, vector<128x64xbf16>
    %c0_4 = arith.constant 0 : index
    %c0_5 = arith.constant 0 : index
    %5 = vector.load %arg3[%c0_4, %c0_5] : memref<64x32xbf16, #tpu.memory_space<vmem>>, vector<64x32xbf16>
    %cst = arith.constant dense<0.000000e+00> : vector<128x32xf32>
    %6 = tpu.matmul %4, %5, %cst {dimension_numbers = #tpu.dot_dimension_numbers<[1], [0], [0], [1], [0, 0, 1, 1], [], []>} : vector<128x64xbf16>, vector<64x32xbf16>, vector<128x32xf32> -> vector<128x32xf32>
    %7 = arith.addf %3, %6 : vector<128x32xf32>
    %c0_6 = arith.constant 0 : index
    %c0_7 = arith.constant 0 : index
    %8 = vector.load %arg6[%c0_6, %c0_7] : memref<128x32xf32, #tpu.memory_space<vmem>>, vector<128x32xf32>
    tpu.vector_store %arg6[%c0_6, %c0_7], %7 {strides = array<i32>} : memref<128x32xf32, #tpu.memory_space<vmem>>, vector<128x32xf32>,
    %c0_i32_8 = arith.constant 0 : i32
    %9 = arith.cmpi eq, %arg1, %c0_i32_8 : i32
    %10 = arith.extui %9 : i1 to i32
    %c0_i32_9 = arith.constant 0 : i32
    %11 = arith.cmpi ne, %10, %c0_i32_9 : i32
    scf.if %11 {
      %c0_10 = arith.constant 0 : index
      %c0_11 = arith.constant 0 : index
      %12 = vector.load %arg6[%c0_10, %c0_11] : memref<128x32xf32, #tpu.memory_space<vmem>>, vector<128x32xf32>
      %c0_12 = arith.constant 0 : index
      %c0_13 = arith.constant 0 : index
      %13 = vector.load %arg4[%c0_12, %c0_13] : memref<1x32xf32, #tpu.memory_space<vmem>>, vector<1x32xf32>
      %14 = vector.broadcast %13 : vector<1x32xf32> to vector<128x32xf32>
      %15 = arith.addf %12, %14 : vector<128x32xf32>
      %cst_14 = arith.constant 0.000000e+00 : f32
      %16 = vector.broadcast %cst_14 : f32 to vector<128x32xf32>
      %17 = arith.maximumf %15, %16 : vector<128x32xf32>
      %c0_15 = arith.constant 0 : index
      %c0_16 = arith.constant 0 : index
      %18 = vector.load %arg5[%c0_15, %c0_16] : memref<128x32xf32, #tpu.memory_space<vmem>>, vector<128x32xf32>
      tpu.vector_store %arg5[%c0_15, %c0_16], %17 {strides = array<i32>} : memref<128x32xf32, #tpu.memory_space<vmem>>, vector<128x32xf32>,
    } else {
    }
    return
  }
  func.func @transform_0(%arg0: i32, %arg1: i32) -> (i32, i32) {
    %c0_i32 = arith.constant 0 : i32
    return %arg0, %arg1 : i32, i32
  }
  func.func @transform_1(%arg0: i32, %arg1: i32) -> (i32, i32) {
    %c0_i32 = arith.constant 0 : i32
    %c0_i32_0 = arith.constant 0 : i32
    return %arg1, %c0_i32 : i32, i32
  }
  func.func @transform_2(%arg0: i32, %arg1: i32) -> (i32, i32) {
    %c0_i32 = arith.constant 0 : i32
    %c0_i32_0 = arith.constant 0 : i32
    %c0_i32_1 = arith.constant 0 : i32
    return %c0_i32, %c0_i32_0 : i32, i32
  }
  func.func @transform_3(%arg0: i32, %arg1: i32) -> (i32, i32) {
    %c0_i32 = arith.constant 0 : i32
    %c0_i32_0 = arith.constant 0 : i32
    return %arg0, %c0_i32 : i32, i32
  }
}

</mosaic_0001>

<llo_original>
// kernel: tile.13
$region0: #{tile.13}
  #allocation0 [shape = 's32[1]{0}', space=sflag, size = 0x4, scoped, tag = 'scoped memory for tile.13']
  %s0 = inlined_call_operand.vmem [shape: f32[8], index: 0, kind: input, shape index: {}]
  %s1 = inlined_call_operand.vmem [shape: f32[4,8], index: 1, kind: output, shape index: {}]
  // Predicated region
  $region2: #{tile.13} parent=0 // pred_check
    _
  $region3: #{tile.13} parent=0 // pred_check_branch
    %3 = sbr.rel (0) target = $region5
  $region4: #{tile.13} parent=0 // pred_region
    _
  $region5: #{tile.13} parent=0 // pred_fallthru
    _
  %v4 = vld [vmem:[%s0] ss:$0 sm:$0xff]
  %5 = vst [vmem:[%s1] sm:$0xf] %v4

// kernel: mul.5
$region0: #{mul.5}
  %s0 = inlined_call_operand.vmem [shape: f32[4,8], index: 0, kind: input, shape index: {}]
  %s1 = inlined_call_operand.vmem [shape: f32[32], index: 1, kind: output, shape index: {}]
  $region1: #{mul.5} parent=0
    #allocation0 [shape = 'u8[4096]{0}', space=vmem, size = 0x1000, scoped, tag = 'scoped mem for output reshape']
    #allocation1 [shape = 'u8[4096]{0}', space=vmem, size = 0x1000, scoped, tag = 'scoped mem for input reshape']
    %s3 = sshll.u32 1, 4
    %s4 = ssub.s32 %s3, 1
    %v5 = vld [vmem:[%s0] sm:%s4]
    %6 = vst [vmem:[#allocation1] sm:%s4] %v5
    %v7 = vld [vmem:[#allocation1] sm:$0x1]
    %vm8 = vcmask 64512
    %9 = vst.msk [vmem:[#allocation0] sm:$0x1] %vm8, %v7
    %s10 = scalar_lea.vmem [#allocation1], 3
    %v11 = vld [vmem:[%s10] sm:$0x1]
    %12 = vrot.lane.b32.xlu0 %v11, 24
    %v13 = vpop.permute.xlu0 %12
    %vm14 = vcmask 261312
    %15 = vst.msk [vmem:[#allocation0] sm:$0x1] %vm14, %v13
    %s16 = scalar_lea.vmem [#allocation1], 2
    %v17 = vld [vmem:[%s16] sm:$0x1]
    %18 = vrot.lane.b32.xlu0 %v17, 16
    %v19 = vpop.permute.xlu0 %18
    %vm20 = vcmask 195712
    %21 = vst.msk [vmem:[#allocation0] sm:$0x1] %vm20, %v19
    %s22 = scalar_lea.vmem [#allocation1], 1
    %v23 = vld [vmem:[%s22] sm:$0x1]
    %24 = vrot.lane.b32.xlu0 %v23, 8
    %v25 = vpop.permute.xlu0 %24
    %vm26 = vcmask 130112
    %27 = vst.msk [vmem:[#allocation0] sm:$0x1] %vm26, %v25
    %s29 = sshll.u32 1, 1
    %s30 = ssub.s32 %s29, 1
    %v32 = vld [vmem:[#allocation0] sm:%s30]
    %s33 = sshll.u32 1, 1
    %s34 = ssub.s32 %s33, 1
    %35 = vst [vmem:[%s1] sm:%s34] %v32

// kernel: tile.19
$region0: #{tile.19}
  %s0 = inlined_call_operand.vmem [shape: f32[4,8], index: 0, kind: input, shape index: {}]
  %s1 = inlined_call_operand.vmem [shape: f32[1,32], index: 1, kind: output, shape index: {}]
  $region1: #{tile.19} parent=0
    #allocation0 [shape = 'u8[4096]{0}', space=vmem, size = 0x1000, scoped, tag = 'scoped mem for output reshape']
    #allocation1 [shape = 'u8[4096]{0}', space=vmem, size = 0x1000, scoped, tag = 'scoped mem for input reshape']
    %s3 = sshll.u32 1, 4
    %s4 = ssub.s32 %s3, 1
    %v5 = vld [vmem:[%s0] sm:%s4]
    %6 = vst [vmem:[#allocation1] sm:%s4] %v5
    %v7 = vld [vmem:[#allocation1] sm:$0x1]
    %vm8 = vcmask 64512
    %9 = vst.msk [vmem:[#allocation0] sm:$0x1] %vm8, %v7
    %s10 = scalar_lea.vmem [#allocation1], 3
    %v11 = vld [vmem:[%s10] sm:$0x1]
    %12 = vrot.lane.b32.xlu0 %v11, 24
    %v13 = vpop.permute.xlu0 %12
    %vm14 = vcmask 261312
    %15 = vst.msk [vmem:[#allocation0] sm:$0x1] %vm14, %v13
    %s16 = scalar_lea.vmem [#allocation1], 2
    %v17 = vld [vmem:[%s16] sm:$0x1]
    %18 = vrot.lane.b32.xlu0 %v17, 16
    %v19 = vpop.permute.xlu0 %18
    %vm20 = vcmask 195712
    %21 = vst.msk [vmem:[#allocation0] sm:$0x1] %vm20, %v19
    %s22 = scalar_lea.vmem [#allocation1], 1
    %v23 = vld [vmem:[%s22] sm:$0x1]
    %24 = vrot.lane.b32.xlu0 %v23, 8
    %v25 = vpop.permute.xlu0 %24
    %vm26 = vcmask 130112
    %27 = vst.msk [vmem:[#allocation0] sm:$0x1] %vm26, %v25
    %s29 = sshll.u32 1, 1
    %s30 = ssub.s32 %s29, 1
    %v32 = vld [vmem:[#allocation0] sm:%s30]
    %s33 = sshll.u32 1, 1
    %s34 = ssub.s32 %s33, 1
    %35 = vst [vmem:[%s1] sm:%s34] %v32

// kernel: deconv_subpixel.1
$region0: #{deconv_subpixel.1}
  #allocation0 [shape = 'u32[]', space=smem, size = 0x4, offset = 0x4, fixed_abs, tag = 'smem constant byte address 0x4 - core index']
  #allocation1 [shape = 'u32[144,128]{1,0:T(1,128)}', space=vmem, size = 0x12000, scoped, tag = 'internal scratch']
  #allocation2 [shape = 'f32[128,32]{1,0:T(8,128)}', space=vmem, size = 0x10000, scoped, tag = 'scratch operand']
  %s0 = inlined_call_operand.vmem [shape: bf16[128,64], index: 0, kind: input, shape index: {}]
  %s1 = inlined_call_operand.vmem [shape: bf16[64,32], index: 1, kind: input, shape index: {}]
  %s2 = inlined_call_operand.vmem [shape: f32[1,32], index: 2, kind: input, shape index: {}]
  %s3 = inlined_call_operand.vmem [shape: f32[128,32], index: 3, kind: output, shape index: {}]
  %s4 = sld [smem:[#allocation0]]
  $region30: #{deconv_subpixel.1} parent=0
    _
  %s6 = ssub.s32 1, %s4
  %s7 = scalar_select 0, %s6, %s4
  // Predicated region
  $region2: #{deconv_subpixel.1} parent=0 // pred_check
    _
  $region3: #{deconv_subpixel.1} parent=0 // pred_check_branch
    %9 = sbr.rel (0) target = $region5
  $region4: #{deconv_subpixel.1} parent=0 // pred_region
    _
  $region5: #{deconv_subpixel.1} parent=0 // pred_fallthru
    _
  // Predicated region
  $region6: #{deconv_subpixel.1} parent=0 // pred_check
    _
  $region7: #{deconv_subpixel.1} parent=0 // pred_check_branch
    %11 = sbr.rel (0) target = $region9
  $region8: #{deconv_subpixel.1} parent=0 // pred_region
    _
  $region9: #{deconv_subpixel.1} parent=0 // pred_fallthru
    _
  // Predicated region
  $region10: #{deconv_subpixel.1} parent=0 // pred_check
    _
  $region11: #{deconv_subpixel.1} parent=0 // pred_check_branch
    %13 = sbr.rel (0) target = $region13
  $region12: #{deconv_subpixel.1} parent=0 // pred_region
    _
  $region13: #{deconv_subpixel.1} parent=0 // pred_fallthru
    _
  %p15 = scmp.eq.s32.totalorder 0, 0
  // Predicated region
  $region14: #{deconv_subpixel.1} parent=0 // pred_check
    %p16 = pneg %p15
  $region15: #{deconv_subpixel.1} parent=0 // pred_check_branch
    %18 = sbr.rel (%p16) target = $region17
  $region16: #{deconv_subpixel.1} parent=0 // pred_region
    %vm19 = vcmask 261120
    %20 = vst.msk [vmem:[#allocation2] sm:$0xff] %vm19, 0.0
    %21 = vst.msk [vmem:[#allocation2 + $0x8] sm:$0xff] %vm19, 0.0
    %22 = vst.msk [vmem:[#allocation2 + $0x10] sm:$0xff] %vm19, 0.0
    %23 = vst.msk [vmem:[#allocation2 + $0x18] sm:$0xff] %vm19, 0.0
    %24 = vst.msk [vmem:[#allocation2 + $0x20] sm:$0xff] %vm19, 0.0
    %25 = vst.msk [vmem:[#allocation2 + $0x28] sm:$0xff] %vm19, 0.0
    %26 = vst.msk [vmem:[#allocation2 + $0x30] sm:$0xff] %vm19, 0.0
    %27 = vst.msk [vmem:[#allocation2 + $0x38] sm:$0xff] %vm19, 0.0
    %28 = vst.msk [vmem:[#allocation2 + $0x40] sm:$0xff] %vm19, 0.0
    %29 = vst.msk [vmem:[#allocation2 + $0x48] sm:$0xff] %vm19, 0.0
    %30 = vst.msk [vmem:[#allocation2 + $0x50] sm:$0xff] %vm19, 0.0
    %31 = vst.msk [vmem:[#allocation2 + $0x58] sm:$0xff] %vm19, 0.0
    %32 = vst.msk [vmem:[#allocation2 + $0x60] sm:$0xff] %vm19, 0.0
    %33 = vst.msk [vmem:[#allocation2 + $0x68] sm:$0xff] %vm19, 0.0
    %34 = vst.msk [vmem:[#allocation2 + $0x70] sm:$0xff] %vm19, 0.0
    %35 = vst.msk [vmem:[#allocation2 + $0x78] sm:$0xff] %vm19, 0.0
  $region17: #{deconv_subpixel.1} parent=0 // pred_fallthru
    _
  %v36 = vld [vmem:[#allocation2] sm:$0xff]
  %v37 = vld [vmem:[#allocation2 + $0x8] sm:$0xff]
  %v38 = vld [vmem:[#allocation2 + $0x10] sm:$0xff]
  %v39 = vld [vmem:[#allocation2 + $0x18] sm:$0xff]
  %v40 = vld [vmem:[#allocation2 + $0x20] sm:$0xff]
  %v41 = vld [vmem:[#allocation2 + $0x28] sm:$0xff]
  %v42 = vld [vmem:[#allocation2 + $0x30] sm:$0xff]
  %v43 = vld [vmem:[#allocation2 + $0x38] sm:$0xff]
  %v44 = vld [vmem:[#allocation2 + $0x40] sm:$0xff]
  %v45 = vld [vmem:[#allocation2 + $0x48] sm:$0xff]
  %v46 = vld [vmem:[#allocation2 + $0x50] sm:$0xff]
  %v47 = vld [vmem:[#allocation2 + $0x58] sm:$0xff]
  %v48 = vld [vmem:[#allocation2 + $0x60] sm:$0xff]
  %v49 = vld [vmem:[#allocation2 + $0x68] sm:$0xff]
  %v50 = vld [vmem:[#allocation2 + $0x70] sm:$0xff]
  %v51 = vld [vmem:[#allocation2 + $0x78] sm:$0xff]
  %v52 = vld [vmem:[%s0] sm:$0xf]
  %v53 = vld [vmem:[%s0 + $0x4] sm:$0xf]
  %v54 = vld [vmem:[%s0 + $0x8] sm:$0xf]
  %v55 = vld [vmem:[%s0 + $0xc] sm:$0xf]
  %v56 = vld [vmem:[%s0 + $0x10] sm:$0xf]
  %v57 = vld [vmem:[%s0 + $0x14] sm:$0xf]
  %v58 = vld [vmem:[%s0 + $0x18] sm:$0xf]
  %v59 = vld [vmem:[%s0 + $0x1c] sm:$0xf]
  %v60 = vld [vmem:[%s0 + $0x20] sm:$0xf]
  %v61 = vld [vmem:[%s0 + $0x24] sm:$0xf]
  %v62 = vld [vmem:[%s0 + $0x28] sm:$0xf]
  %v63 = vld [vmem:[%s0 + $0x2c] sm:$0xf]
  %v64 = vld [vmem:[%s0 + $0x30] sm:$0xf]
  %v65 = vld [vmem:[%s0 + $0x34] sm:$0xf]
  %v66 = vld [vmem:[%s0 + $0x38] sm:$0xf]
  %v67 = vld [vmem:[%s0 + $0x3c] sm:$0xf]
  %v68 = vld [vmem:[%s1] sm:$0xf]
  %v69 = vld [vmem:[%s1 + $0x4] sm:$0xf]
  %v70 = vld [vmem:[%s1 + $0x8] sm:$0xf]
  %v71 = vld [vmem:[%s1 + $0xc] sm:$0xf]
  %v72 = vld [vmem:[%s1 + $0x10] sm:$0xf]
  %v73 = vld [vmem:[%s1 + $0x14] sm:$0xf]
  %v74 = vld [vmem:[%s1 + $0x18] sm:$0xf]
  %v75 = vld [vmem:[%s1 + $0x1c] sm:$0xf]
  %v92 = vunpack.c.l.b16 %v52
  %v93 = vunpack.c.l.b16 %v53
  %v94 = vunpack.c.l.b16 %v54
  %v95 = vunpack.c.l.b16 %v55
  %v96 = vunpack.c.l.b16 %v56
  %v97 = vunpack.c.l.b16 %v57
  %v98 = vunpack.c.l.b16 %v58
  %v99 = vunpack.c.l.b16 %v59
  %v100 = vunpack.c.l.b16 %v60
  %v101 = vunpack.c.l.b16 %v61
  %v102 = vunpack.c.l.b16 %v62
  %v103 = vunpack.c.l.b16 %v63
  %v104 = vunpack.c.l.b16 %v64
  %v105 = vunpack.c.l.b16 %v65
  %v106 = vunpack.c.l.b16 %v66
  %v107 = vunpack.c.l.b16 %v67
  %v108 = vpack.c.b16 %v93, %v92
  %v109 = vpack.c.b16 %v95, %v94
  %v110 = vpack.c.b16 %v97, %v96
  %v111 = vpack.c.b16 %v99, %v98
  %v112 = vpack.c.b16 %v101, %v100
  %v113 = vpack.c.b16 %v103, %v102
  %v114 = vpack.c.b16 %v105, %v104
  %v115 = vpack.c.b16 %v107, %v106
  %v124 = vunpack.c.l.b16 %v68
  %v125 = vunpack.c.l.b16 %v69
  %v126 = vunpack.c.l.b16 %v70
  %v127 = vunpack.c.l.b16 %v71
  %v128 = vunpack.c.l.b16 %v72
  %v129 = vunpack.c.l.b16 %v73
  %v130 = vunpack.c.l.b16 %v74
  %v131 = vunpack.c.l.b16 %v75
  %v132 = vpack.c.b16 %v125, %v124
  %v133 = vpack.c.b16 %v127, %v126
  %v134 = vpack.c.b16 %v129, %v128
  %v135 = vpack.c.b16 %v131, %v130
  %vm140 = vcmask 523264
  %v142 = vsel %vm140, %v108, 0
  %v145 = vsel %vm140, %v109, 0
  %v148 = vsel %vm140, %v110, 0
  %v151 = vsel %vm140, %v111, 0
  %v154 = vsel %vm140, %v112, 0
  %v157 = vsel %vm140, %v113, 0
  %v160 = vsel %vm140, %v114, 0
  %v163 = vsel %vm140, %v115, 0
  %165 = vmatprep.subr.bf16.mxu0 0
  %166 = vmatpush1.bf16.msra.mxu0 0
  %167 = vmatprep.subr.bf16.mxu0 0
  %168 = vmatpush1.bf16.msra.mxu0 0
  %169 = vmatprep.subr.bf16.mxu0 0
  %170 = vmatpush1.bf16.msra.mxu0 0
  %171 = vmatprep.subr.bf16.mxu0 0
  %172 = vmatpush1.bf16.msra.mxu0 0
  %173 = vmatprep.subr.bf16.mxu0 0
  %174 = vmatpush1.bf16.msra.mxu0 %v135
  %175 = vmatprep.subr.bf16.mxu0 0
  %176 = vmatpush1.bf16.msra.mxu0 %v134
  %177 = vmatprep.subr.bf16.mxu0 0
  %178 = vmatpush1.bf16.msra.mxu0 %v133
  %179 = vmatprep.subr.bf16.mxu0 0
  %180 = vmatpush1.bf16.msra.mxu0 %v132
  %181 = vmatprep.subr.bf16.mxu0 0
  %182 = vmatpush2.bf16.msra.mxu0 0
  %183 = vmatprep.subr.bf16.mxu0 0
  %184 = vmatpush2.bf16.msra.mxu0 0
  %185 = vmatprep.subr.bf16.mxu0 0
  %186 = vmatpush2.bf16.msra.mxu0 0
  %187 = vmatprep.subr.bf16.mxu0 0
  %188 = vmatpush2.bf16.msra.mxu0 0
  %189 = vmatprep.subr.bf16.mxu0 0
  %190 = vmatpush2.bf16.msra.mxu0 0
  %191 = vmatprep.subr.bf16.mxu0 0
  %192 = vmatpush2.bf16.msra.mxu0 0
  %193 = vmatprep.subr.bf16.mxu0 0
  %194 = vmatpush2.bf16.msra.mxu0 0
  %195 = vmatprep.subr.bf16.mxu0 0
  %196 = vmatpush2.bf16.msra.mxu0 0
  %197 = vmatprep.mubr.bf16.mxu0 0
  %198 = vmatmul.mubr.bf16.gmra.mxu0 %v142
  %v199 = vpop.f32.mrf.mxu0
  %v200 = vadd.f32 0.0, %v199
  %v201 = vpop.f32.mrf.mxu0
  %v202 = vpop.f32.mrf.mxu0
  %v203 = vadd.f32 0.0, %v202
  %v204 = vpop.f32.mrf.mxu0
  %205 = vmatprep.mubr.bf16.mxu0 0
  %206 = vmatmul.mubr.bf16.gmra.mxu0 %v145
  %v207 = vpop.f32.mrf.mxu0
  %v208 = vadd.f32 0.0, %v207
  %v209 = vpop.f32.mrf.mxu0
  %v210 = vpop.f32.mrf.mxu0
  %v211 = vadd.f32 0.0, %v210
  %v212 = vpop.f32.mrf.mxu0
  %213 = vmatprep.mubr.bf16.mxu0 0
  %214 = vmatmul.mubr.bf16.gmra.mxu0 %v148
  %v215 = vpop.f32.mrf.mxu0
  %v216 = vadd.f32 0.0, %v215
  %v217 = vpop.f32.mrf.mxu0
  %v218 = vpop.f32.mrf.mxu0
  %v219 = vadd.f32 0.0, %v218
  %v220 = vpop.f32.mrf.mxu0
  %221 = vmatprep.mubr.bf16.mxu0 0
  %222 = vmatmul.mubr.bf16.gmra.mxu0 %v151
  %v223 = vpop.f32.mrf.mxu0
  %v224 = vadd.f32 0.0, %v223
  %v225 = vpop.f32.mrf.mxu0
  %v226 = vpop.f32.mrf.mxu0
  %v227 = vadd.f32 0.0, %v226
  %v228 = vpop.f32.mrf.mxu0
  %229 = vmatprep.mubr.bf16.mxu0 0
  %230 = vmatmul.mubr.bf16.gmra.mxu0 %v154
  %v231 = vpop.f32.mrf.mxu0
  %v232 = vadd.f32 0.0, %v231
  %v233 = vpop.f32.mrf.mxu0
  %v234 = vpop.f32.mrf.mxu0
  %v235 = vadd.f32 0.0, %v234
  %v236 = vpop.f32.mrf.mxu0
  %237 = vmatprep.mubr.bf16.mxu0 0
  %238 = vmatmul.mubr.bf16.gmra.mxu0 %v157
  %v239 = vpop.f32.mrf.mxu0
  %v240 = vadd.f32 0.0, %v239
  %v241 = vpop.f32.mrf.mxu0
  %v242 = vpop.f32.mrf.mxu0
  %v243 = vadd.f32 0.0, %v242
  %v244 = vpop.f32.mrf.mxu0
  %245 = vmatprep.mubr.bf16.mxu0 0
  %246 = vmatmul.mubr.bf16.gmra.mxu0 %v160
  %v247 = vpop.f32.mrf.mxu0
  %v248 = vadd.f32 0.0, %v247
  %v249 = vpop.f32.mrf.mxu0
  %v250 = vpop.f32.mrf.mxu0
  %v251 = vadd.f32 0.0, %v250
  %v252 = vpop.f32.mrf.mxu0
  %253 = vmatprep.mubr.bf16.mxu0 0
  %254 = vmatmul.mubr.bf16.gmra.mxu0 %v163
  %v255 = vpop.f32.mrf.mxu0
  %v256 = vadd.f32 0.0, %v255
  %v257 = vpop.f32.mrf.mxu0
  %v258 = vpop.f32.mrf.mxu0
  %v259 = vadd.f32 0.0, %v258
  %v260 = vpop.f32.mrf.mxu0
  %261 = vdwg.mxu0
  %v262 = vadd.f32 %v36, %v200
  %v263 = vadd.f32 %v37, %v203
  %v264 = vadd.f32 %v38, %v208
  %v265 = vadd.f32 %v39, %v211
  %v266 = vadd.f32 %v40, %v216
  %v267 = vadd.f32 %v41, %v219
  %v268 = vadd.f32 %v42, %v224
  %v269 = vadd.f32 %v43, %v227
  %v270 = vadd.f32 %v44, %v232
  %v271 = vadd.f32 %v45, %v235
  %v272 = vadd.f32 %v46, %v240
  %v273 = vadd.f32 %v47, %v243
  %v274 = vadd.f32 %v48, %v248
  %v275 = vadd.f32 %v49, %v251
  %v276 = vadd.f32 %v50, %v256
  %v277 = vadd.f32 %v51, %v259
  %vm278 = vcmask 261120
  %279 = vst.msk [vmem:[#allocation2] sm:$0xff] %vm278, %v262
  %280 = vst.msk [vmem:[#allocation2 + $0x8] sm:$0xff] %vm278, %v263
  %281 = vst.msk [vmem:[#allocation2 + $0x10] sm:$0xff] %vm278, %v264
  %282 = vst.msk [vmem:[#allocation2 + $0x18] sm:$0xff] %vm278, %v265
  %283 = vst.msk [vmem:[#allocation2 + $0x20] sm:$0xff] %vm278, %v266
  %284 = vst.msk [vmem:[#allocation2 + $0x28] sm:$0xff] %vm278, %v267
  %285 = vst.msk [vmem:[#allocation2 + $0x30] sm:$0xff] %vm278, %v268
  %286 = vst.msk [vmem:[#allocation2 + $0x38] sm:$0xff] %vm278, %v269
  %287 = vst.msk [vmem:[#allocation2 + $0x40] sm:$0xff] %vm278, %v270
  %288 = vst.msk [vmem:[#allocation2 + $0x48] sm:$0xff] %vm278, %v271
  %289 = vst.msk [vmem:[#allocation2 + $0x50] sm:$0xff] %vm278, %v272
  %290 = vst.msk [vmem:[#allocation2 + $0x58] sm:$0xff] %vm278, %v273
  %291 = vst.msk [vmem:[#allocation2 + $0x60] sm:$0xff] %vm278, %v274
  %292 = vst.msk [vmem:[#allocation2 + $0x68] sm:$0xff] %vm278, %v275
  %293 = vst.msk [vmem:[#allocation2 + $0x70] sm:$0xff] %vm278, %v276
  %294 = vst.msk [vmem:[#allocation2 + $0x78] sm:$0xff] %vm278, %v277
  // Predicated region
  $region18: #{deconv_subpixel.1} parent=0 // pred_check
    %p295 = pneg %p15
  $region19: #{deconv_subpixel.1} parent=0 // pred_check_branch
    %297 = sbr.rel (%p295) target = $region21
  $region20: #{deconv_subpixel.1} parent=0 // pred_region
    %v298 = vld [vmem:[#allocation2] sm:$0xff]
    %v299 = vld [vmem:[#allocation2 + $0x8] sm:$0xff]
    %v300 = vld [vmem:[#allocation2 + $0x10] sm:$0xff]
    %v301 = vld [vmem:[#allocation2 + $0x18] sm:$0xff]
    %v302 = vld [vmem:[#allocation2 + $0x20] sm:$0xff]
    %v303 = vld [vmem:[#allocation2 + $0x28] sm:$0xff]
    %v304 = vld [vmem:[#allocation2 + $0x30] sm:$0xff]
    %v305 = vld [vmem:[#allocation2 + $0x38] sm:$0xff]
    %v306 = vld [vmem:[#allocation2 + $0x40] sm:$0xff]
    %v307 = vld [vmem:[#allocation2 + $0x48] sm:$0xff]
    %v308 = vld [vmem:[#allocation2 + $0x50] sm:$0xff]
    %v309 = vld [vmem:[#allocation2 + $0x58] sm:$0xff]
    %v310 = vld [vmem:[#allocation2 + $0x60] sm:$0xff]
    %v311 = vld [vmem:[#allocation2 + $0x68] sm:$0xff]
    %v312 = vld [vmem:[#allocation2 + $0x70] sm:$0xff]
    %v313 = vld [vmem:[#allocation2 + $0x78] sm:$0xff]
    %v314 = vld [vmem:[%s2] sm:$0x1]
    %v316 = vlaneseq
    %v317 = vshrl.u32 %v316, 7
    %v318 = vsub.s32 0, %v317
    %v319 = vrot.slane %v314, %v318
    %v321 = vadd.f32 %v298, %v319
    %v322 = vadd.f32 %v299, %v319
    %v323 = vadd.f32 %v300, %v319
    %v324 = vadd.f32 %v301, %v319
    %v325 = vadd.f32 %v302, %v319
    %v326 = vadd.f32 %v303, %v319
    %v327 = vadd.f32 %v304, %v319
    %v328 = vadd.f32 %v305, %v319
    %v329 = vadd.f32 %v306, %v319
    %v330 = vadd.f32 %v307, %v319
    %v331 = vadd.f32 %v308, %v319
    %v332 = vadd.f32 %v309, %v319
    %v333 = vadd.f32 %v310, %v319
    %v334 = vadd.f32 %v311, %v319
    %v335 = vadd.f32 %v312, %v319
    %v336 = vadd.f32 %v313, %v319
    %v337 = vmax.f32 %v321, 0.0
    %v338 = vmax.f32 %v322, 0.0
    %v339 = vmax.f32 %v323, 0.0
    %v340 = vmax.f32 %v324, 0.0
    %v341 = vmax.f32 %v325, 0.0
    %v342 = vmax.f32 %v326, 0.0
    %v343 = vmax.f32 %v327, 0.0
    %v344 = vmax.f32 %v328, 0.0
    %v345 = vmax.f32 %v329, 0.0
    %v346 = vmax.f32 %v330, 0.0
    %v347 = vmax.f32 %v331, 0.0
    %v348 = vmax.f32 %v332, 0.0
    %v349 = vmax.f32 %v333, 0.0
    %v350 = vmax.f32 %v334, 0.0
    %v351 = vmax.f32 %v335, 0.0
    %v352 = vmax.f32 %v336, 0.0
    %353 = vst.msk [vmem:[%s3] sm:$0xff] %vm278, %v337
    %354 = vst.msk [vmem:[%s3 + $0x8] sm:$0xff] %vm278, %v338
    %355 = vst.msk [vmem:[%s3 + $0x10] sm:$0xff] %vm278, %v339
    %356 = vst.msk [vmem:[%s3 + $0x18] sm:$0xff] %vm278, %v340
    %357 = vst.msk [vmem:[%s3 + $0x20] sm:$0xff] %vm278, %v341
    %358 = vst.msk [vmem:[%s3 + $0x28] sm:$0xff] %vm278, %v342
    %359 = vst.msk [vmem:[%s3 + $0x30] sm:$0xff] %vm278, %v343
    %360 = vst.msk [vmem:[%s3 + $0x38] sm:$0xff] %vm278, %v344
    %361 = vst.msk [vmem:[%s3 + $0x40] sm:$0xff] %vm278, %v345
    %362 = vst.msk [vmem:[%s3 + $0x48] sm:$0xff] %vm278, %v346
    %363 = vst.msk [vmem:[%s3 + $0x50] sm:$0xff] %vm278, %v347
    %364 = vst.msk [vmem:[%s3 + $0x58] sm:$0xff] %vm278, %v348
    %365 = vst.msk [vmem:[%s3 + $0x60] sm:$0xff] %vm278, %v349
    %366 = vst.msk [vmem:[%s3 + $0x68] sm:$0xff] %vm278, %v350
    %367 = vst.msk [vmem:[%s3 + $0x70] sm:$0xff] %vm278, %v351
    %368 = vst.msk [vmem:[%s3 + $0x78] sm:$0xff] %vm278, %v352
  $region21: #{deconv_subpixel.1} parent=0 // pred_fallthru
    _
  // Predicated region
  $region22: #{deconv_subpixel.1} parent=0 // pred_check
    _
  $region23: #{deconv_subpixel.1} parent=0 // pred_check_branch
    %370 = sbr.rel (0) target = $region25
  $region24: #{deconv_subpixel.1} parent=0 // pred_region
    _
  $region25: #{deconv_subpixel.1} parent=0 // pred_fallthru
    _
  // Predicated region
  $region26: #{deconv_subpixel.1} parent=0 // pred_check
    _
  $region27: #{deconv_subpixel.1} parent=0 // pred_check_branch
    %372 = sbr.rel (0) target = $region29
  $region28: #{deconv_subpixel.1} parent=0 // pred_region
    _
  $region29: #{deconv_subpixel.1} parent=0 // pred_fallthru
    _

</llo_original>
